<compile_context>
chip_gen: v5e
topology: v5e:2x2
jax: 0.10.0
libtpu: 0.0.40
codegen_flags: <defaults>
</compile_context>

<pallas_src>
import jax
import jax.numpy as jnp
from jax.experimental import pallas as pl
from jax.experimental.pallas import tpu as pltpu


def _round_up(x, m):
    return ((x + m - 1) // m) * m


# ---------------------------------------------------------------------------
# Kernels
# ---------------------------------------------------------------------------
def _linear_bias_kernel(x_ref, w_ref, b_ref, o_ref):
    # x_ref: (tm, K)   row tile of flattened inputs
    # w_ref: (K, tn)   weight tile (contraction-major for the MXU)
    # b_ref: (1, tn)   bias tile
    # o_ref: (tm, tn)  output tile
    acc = jnp.dot(x_ref[...], w_ref[...], preferred_element_type=jnp.float32)
    o_ref[...] = (acc + b_ref[...]).astype(o_ref.dtype)


def _linear_bias_kernel_ktiled(x_ref, w_ref, b_ref, o_ref, acc_ref):
    # Contraction tiled over the last ("arbitrary") grid axis; acc_ref persists
    # across the K axis because the output block index is constant along it.
    k = pl.program_id(2)

    @pl.when(k == 0)
    def _():
        acc_ref[...] = jnp.zeros_like(acc_ref)

    acc_ref[...] += jnp.dot(x_ref[...], w_ref[...],
                            preferred_element_type=jnp.float32)

    @pl.when(k == pl.num_programs(2) - 1)
    def _():
        o_ref[...] = (acc_ref[...] + b_ref[...]).astype(o_ref.dtype)


# ---------------------------------------------------------------------------
# Parameter prep (one-time, hoisted out of the forward path)
# ---------------------------------------------------------------------------
def prepare_decoder_params(weight, bias, compute_dtype=None):
    """Transpose the PyTorch (out, in) weight to (in, out) once and pad the output
    dimension to a multiple of 128 (lane-dense stores). Returns (wt, bias2d, n_out)."""
    n_out, _ = weight.shape
    n_pad = _round_up(max(n_out, 1), 128)
    wt = jnp.transpose(weight)                      # (K, N)
    b = bias
    if n_pad != n_out:
        wt = jnp.pad(wt, ((0, 0), (0, n_pad - n_out)))
        b = jnp.pad(bias, (0, n_pad - n_out))
    if compute_dtype is not None:
        wt = wt.astype(compute_dtype)
    b2 = b.reshape(1, n_pad).astype(jnp.float32)    # bias stays f32 (f32 accumulation)
    return wt, b2, n_out


# ---------------------------------------------------------------------------
# Forward
# ---------------------------------------------------------------------------
def decoder_forward(x, wt, b2, n_out, *, compute_dtype=None,
                    tm_cap=256, tn_req=256, tk=None, out_dtype=None):
    """y = x @ wt + b  where wt = weight.T (pre-padded along N to a 128 multiple).

    x        : (..., hidden_size)
    wt       : (hidden_size, n_pad)   from prepare_decoder_params
    b2       : (1, n_pad)
    n_out    : original input_size (columns of the true output)
    returns  : (..., n_out)
    """
    *lead, K = x.shape
    n_pad = wt.shape[1]
    out_dtype = out_dtype or x.dtype

    x2 = x.reshape(-1, K)
    M = x2.shape[0]
    if compute_dtype is not None and x2.dtype != compute_dtype:
        x2 = x2.astype(compute_dtype)

    # Row tile: single full-extent tile when M is small (no pad / slice round-trip),
    # otherwise tm=tm_cap (256 keeps the x tile v7x-VMEM-safe even at large K).
    if M <= tm_cap:
        tm, m_pad = M, M
    else:
        tm = tm_cap
        m_pad = _round_up(M, tm)
        if m_pad != M:
            x2 = jnp.pad(x2, ((0, m_pad - M), (0, 0)))

    # N tile: largest multiple of 128 (<= tn_req) that divides the padded N.
    tn = max(128, min(tn_req, n_pad) // 128 * 128)
    while n_pad % tn != 0:
        tn -= 128

    # K tiling: auto-enable for big hidden sizes, or when explicitly requested.
    if tk is None and K >= 2048 and K % 512 == 0:
        tk = 512
    k_tiled = (tk is not None) and (tk % 128 == 0) and (K % tk == 0) and (K > tk)

    # VMEM budget & cost estimate sized to the actual tile footprint.
    xb = x2.dtype.itemsize
    wb = wt.dtype.itemsize
    ob = jnp.dtype(out_dtype).itemsize
    kblk = tk if k_tiled else K
    footprint = 2 * (tm * kblk * xb + kblk * tn * wb + tm * tn * ob + tn * 4) \
        + tm * tn * 4
    vmem_limit = int(min(100 << 20, max(32 << 20, 3 * footprint)))
    cost = pl.CostEstimate(
        flops=2 * m_pad * K * n_pad,
        transcendentals=0,
        bytes_accessed=int(m_pad * K * xb + K * n_pad * wb
                           + n_pad * 4 + m_pad * n_pad * ob),
    )

    if k_tiled:
        out = pl.pallas_call(
            _linear_bias_kernel_ktiled,
            out_shape=jax.ShapeDtypeStruct((m_pad, n_pad), out_dtype),
            grid=(m_pad // tm, n_pad // tn, K // tk),
            in_specs=[
                pl.BlockSpec((tm, tk), lambda i, j, k: (i, k)),
                pl.BlockSpec((tk, tn), lambda i, j, k: (k, j)),
                pl.BlockSpec((1, tn), lambda i, j, k: (0, j)),
            ],
            out_specs=pl.BlockSpec((tm, tn), lambda i, j, k: (i, j)),
            scratch_shapes=[pltpu.VMEM((tm, tn), jnp.float32)],
            compiler_params=pltpu.CompilerParams(
                dimension_semantics=("parallel", "parallel", "arbitrary"),
                vmem_limit_bytes=vmem_limit),
            cost_estimate=cost,
        )(x2, wt, b2)
    else:
        out = pl.pallas_call(
            _linear_bias_kernel,
            out_shape=jax.ShapeDtypeStruct((m_pad, n_pad), out_dtype),
            grid=(m_pad // tm, n_pad // tn),
            in_specs=[
                pl.BlockSpec((tm, K), lambda i, j: (i, 0)),
                pl.BlockSpec((K, tn), lambda i, j: (0, j)),
                pl.BlockSpec((1, tn), lambda i, j: (0, j)),
            ],
            out_specs=pl.BlockSpec((tm, tn), lambda i, j: (i, j)),
            compiler_params=pltpu.CompilerParams(
                dimension_semantics=("parallel", "parallel"),
                vmem_limit_bytes=vmem_limit),
            cost_estimate=cost,
        )(x2, wt, b2)

    if m_pad != M:
        out = out[:M]
    if n_pad != n_out:
        out = out[:, :n_out]
    return out.reshape(*lead, n_out)


# ---------------------------------------------------------------------------
# Init / reference / self-test
# ---------------------------------------------------------------------------
def init_params(key, hidden_size, input_size):
    """Deterministic init in PyTorch nn.Linear layout: weight (out, in), bias (out,)."""
    kw, kb = jax.random.split(key)
    s = 1.0 / jnp.sqrt(jnp.float32(hidden_size))
    weight = jax.random.uniform(kw, (input_size, hidden_size), jnp.float32, -s, s)
    bias = jax.random.uniform(kb, (input_size,), jnp.float32, -s, s)
    return weight, bias


def _reference(x, weight, bias):
    """Plain-JAX reference of nn.Linear for validation."""
    return jnp.dot(x, weight.T) + bias


if __name__ == "__main__":
    # Small shapes consistent with the module: batch=2, seq=8, hidden_size=32 -> input_size=4.
    hidden_size, input_size = 32, 4
    batch, seq = 2, 8

    key = jax.random.PRNGKey(0)
    kx, kp, kx2, kp2 = jax.random.split(key, 4)
    x = jax.random.normal(kx, (batch, seq, hidden_size), jnp.float32)
    weight, bias = init_params(kp, hidden_size, input_size)
    y_ref = _reference(x, weight, bias)

    # 1) f32 path (numerics match the PyTorch module).
    wt, b2, n_out = prepare_decoder_params(weight, bias)
    y = jax.block_until_ready(decoder_forward(x, wt, b2, n_out))
    assert y.shape == (batch, seq, input_size), y.shape
    assert jnp.allclose(y, y_ref, atol=1e-4, rtol=1e-3)

    # 2) bf16-MXU path (v6e/v7x throughput option), f32 accumulation, looser tolerance.
    wt_bf, b2_bf, _ = prepare_decoder_params(weight, bias, compute_dtype=jnp.bfloat16)
    y_bf = jax.block_until_ready(
        decoder_forward(x, wt_bf, b2_bf, n_out, compute_dtype=jnp.bfloat16))
    assert y_bf.shape == (batch, seq, input_size)
    assert jnp.allclose(y_bf, y_ref, atol=5e-2, rtol=5e-2)

    # 3) K-tiled + N-tiled path (accumulator kernel) at a modest size.
    hidden2, input2 = 256, 384
    x_b = jax.random.normal(kx2, (batch, seq, hidden2), jnp.float32)
    w_b, bias_b = init_params(kp2, hidden2, input2)
    wt_b, b2_b, n_out_b = prepare_decoder_params(w_b, bias_b)
    y_b = jax.block_until_ready(decoder_forward(x_b, wt_b, b2_b, n_out_b, tk=128))
    assert y_b.shape == (batch, seq, input2), y_b.shape
    assert jnp.allclose(y_b, _reference(x_b, w_b, bias_b), atol=1e-4, rtol=1e-3)

    print("KERNEL_OK")
</pallas_src>

<mosaic_0001>
module attributes {stable_mosaic.version = 11 : i64} {
  func.func @_linear_bias_kernel(%arg0: i32, %arg1: i32, %arg2: memref<16x32xf32, #tpu.memory_space<vmem>>, %arg3: memref<32x128xf32, #tpu.memory_space<vmem>>, %arg4: memref<1x128xf32, #tpu.memory_space<vmem>>, %arg5: memref<16x128xf32, #tpu.memory_space<vmem>>) attributes {dimension_semantics = [#tpu.dimension_semantics<parallel>, #tpu.dimension_semantics<parallel>], iteration_bounds = array<i64: 1, 1>, scalar_prefetch = 0 : i64, scratch_operands = 0 : i64, tpu.core_type = #tpu.core_type<tc>, window_params = [{transform_indices = @transform_0, window_bounds = array<i64: 16, 32>}, {transform_indices = @transform_1, window_bounds = array<i64: 32, 128>}, {transform_indices = @transform_2, window_bounds = array<i64: 1, 128>}, {transform_indices = @transform_3, window_bounds = array<i64: 16, 128>}]} {
    %c0 = arith.constant 0 : index
    %c0_0 = arith.constant 0 : index
    %0 = vector.load %arg2[%c0, %c0_0] : memref<16x32xf32, #tpu.memory_space<vmem>>, vector<16x32xf32>
    %c0_1 = arith.constant 0 : index
    %c0_2 = arith.constant 0 : index
    %1 = vector.load %arg3[%c0_1, %c0_2] : memref<32x128xf32, #tpu.memory_space<vmem>>, vector<32x128xf32>
    %cst = arith.constant dense<0.000000e+00> : vector<16x128xf32>
    %2 = tpu.matmul %0, %1, %cst {dimension_numbers = #tpu.dot_dimension_numbers<[1], [0], [0], [1], [0, 0, 1, 1], [], []>} : vector<16x32xf32>, vector<32x128xf32>, vector<16x128xf32> -> vector<16x128xf32>
    %c0_3 = arith.constant 0 : index
    %c0_4 = arith.constant 0 : index
    %3 = vector.load %arg4[%c0_3, %c0_4] : memref<1x128xf32, #tpu.memory_space<vmem>>, vector<1x128xf32>
    %4 = vector.broadcast %3 : vector<1x128xf32> to vector<16x128xf32>
    %5 = arith.addf %2, %4 : vector<16x128xf32>
    %c0_5 = arith.constant 0 : index
    %c0_6 = arith.constant 0 : index
    %6 = vector.load %arg5[%c0_5, %c0_6] : memref<16x128xf32, #tpu.memory_space<vmem>>, vector<16x128xf32>
    tpu.vector_store %arg5[%c0_5, %c0_6], %5 {strides = array<i32>} : memref<16x128xf32, #tpu.memory_space<vmem>>, vector<16x128xf32>,
    return
  }
  func.func @transform_0(%arg0: i32, %arg1: i32) -> (i32, i32) {
    %c0_i32 = arith.constant 0 : i32
    %c0_i32_0 = arith.constant 0 : i32
    return %arg0, %c0_i32 : i32, i32
  }
  func.func @transform_1(%arg0: i32, %arg1: i32) -> (i32, i32) {
    %c0_i32 = arith.constant 0 : i32
    %c0_i32_0 = arith.constant 0 : i32
    return %c0_i32, %arg1 : i32, i32
  }
  func.func @transform_2(%arg0: i32, %arg1: i32) -> (i32, i32) {
    %c0_i32 = arith.constant 0 : i32
    %c0_i32_0 = arith.constant 0 : i32
    return %c0_i32, %arg1 : i32, i32
  }
  func.func @transform_3(%arg0: i32, %arg1: i32) -> (i32, i32) {
    %c0_i32 = arith.constant 0 : i32
    return %arg0, %arg1 : i32, i32
  }
}

</mosaic_0001>

<llo_original>
// kernel: tpu_custom_call.1
$region0: #{tpu_custom_call.1}
  #allocation0 [shape = 'u32[]', space=smem, size = 0x4, offset = 0x4, fixed_abs, tag = 'smem constant byte address 0x4 - core index']
  #allocation1 [shape = 'u32[72,128]{1,0:T(1,128)}', space=vmem, size = 0x9000, scoped, tag = 'internal scratch']
  %s0 = inlined_call_operand.hbm [shape: f32[16,32], index: 0, kind: input, shape index: {}]
  %s1 = inlined_call_operand.hbm [shape: f32[32,128], index: 1, kind: input, shape index: {}]
  %s2 = inlined_call_operand.vmem [shape: f32[1,128], index: 2, kind: input, shape index: {}]
  %s3 = inlined_call_operand.hbm [shape: f32[16,128], index: 3, kind: output, shape index: {}]
  %s4 = sld [smem:[#allocation0]]
  $region30: #{tpu_custom_call.1} parent=0
    _
  %s6 = ssub.s32 1, %s4
  %s7 = scalar_select 0, %s6, %s4
  $region1: #{tpu_custom_call.1} parent=0
    #allocation2 [shape = 'u8[8192]{0}', space=vmem, size = 0x2000, scoped, tag = 'input window, operand 0, single buffered']
    #allocation3 [shape = 's32[1]{0}', space=sflag, size = 0x4, scoped, tag = 'scoped memory for tpu_custom_call.1']
    #allocation4 [shape = 's32[1]{0}', space=sflag, size = 0x4, scoped, tag = 'scoped memory for tpu_custom_call.1']
    #allocation5 [shape = 'u8[16384]{0}', space=vmem, size = 0x4000, scoped, tag = 'input window, operand 1, single buffered']
    #allocation6 [shape = 's32[1]{0}', space=sflag, size = 0x4, scoped, tag = 'scoped memory for tpu_custom_call.1']
    #allocation7 [shape = 'u8[8192]{0}', space=vmem, size = 0x2000, scoped, tag = 'output window, operand 0, single buffered']
    %8 = vsyncpa [#allocation3], 0
    %9 = vsyncpa [#allocation6], 0
    %10 = vsyncpa [#allocation4], 0
    // Predicated region
    $region2: #{tpu_custom_call.1} parent=1 // pred_check
      _
    $region3: #{tpu_custom_call.1} parent=1 // pred_check_branch
      %12 = sbr.rel (0) target = $region5
    $region4: #{tpu_custom_call.1} parent=1 // pred_region
      %14 = vsyncadd [#allocation3], 0
      %s15 = sshll.u32 %s0, 4
      %s16 = int_to_ptr.hbm [resolvable:$true] %s15
      %s17 = sshll.u32 [#allocation2], 4
      %s18 = int_to_ptr.vmem [resolvable:$true] %s17
      %23 = dma.hbm_to_vmem [thread:$0]  %s16, 256, %s18, [#allocation3], 128, 128, 8
    $region5: #{tpu_custom_call.1} parent=1 // pred_fallthru
      _
    // Predicated region
    $region6: #{tpu_custom_call.1} parent=1 // pred_check
      _
    $region7: #{tpu_custom_call.1} parent=1 // pred_check_branch
      %25 = sbr.rel (0) target = $region9
    $region8: #{tpu_custom_call.1} parent=1 // pred_region
      %27 = vsyncadd [#allocation6], 0
      %s28 = sshll.u32 %s1, 4
      %s29 = int_to_ptr.hbm [resolvable:$true] %s28
      %s30 = sshll.u32 [#allocation5], 4
      %s31 = int_to_ptr.vmem [resolvable:$true] %s30
      %36 = dma.hbm_to_vmem [thread:$0]  %s29, 512, %s31, [#allocation6], 128, 128, 8
    $region9: #{tpu_custom_call.1} parent=1 // pred_fallthru
      _
    // Predicated region
    $region10: #{tpu_custom_call.1} parent=1 // pred_check
      _
    $region11: #{tpu_custom_call.1} parent=1 // pred_check_branch
      %38 = sbr.rel (0) target = $region13
    $region12: #{tpu_custom_call.1} parent=1 // pred_region
      _
    $region13: #{tpu_custom_call.1} parent=1 // pred_fallthru
      _
    // Predicated region
    $region14: #{tpu_custom_call.1} parent=1 // pred_check
      _
    $region15: #{tpu_custom_call.1} parent=1 // pred_check_branch
      %40 = sbr.rel (0) target = $region17
    $region16: #{tpu_custom_call.1} parent=1 // pred_region
      %42 = dma.done [#allocation3], 256
    $region17: #{tpu_custom_call.1} parent=1 // pred_fallthru
      _
    // Predicated region
    $region18: #{tpu_custom_call.1} parent=1 // pred_check
      _
    $region19: #{tpu_custom_call.1} parent=1 // pred_check_branch
      %44 = sbr.rel (0) target = $region21
    $region20: #{tpu_custom_call.1} parent=1 // pred_region
      %46 = dma.done [#allocation6], 512
    $region21: #{tpu_custom_call.1} parent=1 // pred_fallthru
      _
    %v47 = vld [vmem:[#allocation2] sm:$0xff]
    %v48 = vld [vmem:[#allocation2 + $0x8] sm:$0xff]
    %v49 = vld [vmem:[#allocation5] sm:$0xff]
    %v50 = vld [vmem:[#allocation5 + $0x8] sm:$0xff]
    %v51 = vld [vmem:[#allocation5 + $0x10] sm:$0xff]
    %v52 = vld [vmem:[#allocation5 + $0x18] sm:$0xff]
    %v53 = vld [vmem:[%s2] sm:$0x1]
    %v55 = vperm.slane %v53, 0
    %vm57 = vcmask 261120
    %v59 = vsel %vm57, %v47, 0
    %v62 = vsel %vm57, %v48, 0
    %64 = vmatpush.msra.mxu0 0.0
    %65 = vmatpush.msra.mxu0 0.0
    %66 = vmatpush.msra.mxu0 0.0
    %67 = vmatpush.msra.mxu0 0.0
    %68 = vmatpush.msra.mxu0 0.0
    %69 = vmatpush.msra.mxu0 0.0
    %70 = vmatpush.msra.mxu0 0.0
    %71 = vmatpush.msra.mxu0 0.0
    %72 = vmatpush.msra.mxu0 0.0
    %73 = vmatpush.msra.mxu0 0.0
    %74 = vmatpush.msra.mxu0 0.0
    %75 = vmatpush.msra.mxu0 0.0
    %76 = vmatpush.msra.mxu0 %v52
    %77 = vmatpush.msra.mxu0 %v51
    %78 = vmatpush.msra.mxu0 %v50
    %79 = vmatpush.msra.mxu0 %v49
    %80 = vmatmul.f32.gmra.mxu0 %v59
    %v81 = vpop.f32.mrf.mxu0
    %v82 = vadd.f32 %v55, %v81
    %83 = vmatmul.f32.gmra.mxu0 %v62
    %v84 = vpop.f32.mrf.mxu0
    %v85 = vadd.f32 %v55, %v84
    %86 = vdwg.mxu0
    %87 = vst [vmem:[#allocation7] sm:$0xff] %v82
    %88 = vst [vmem:[#allocation7 + $0x8] sm:$0xff] %v85
    // Predicated region
    $region22: #{tpu_custom_call.1} parent=1 // pred_check
      _
    $region23: #{tpu_custom_call.1} parent=1 // pred_check_branch
      %90 = sbr.rel (0) target = $region25
    $region24: #{tpu_custom_call.1} parent=1 // pred_region
      %92 = vsyncadd [#allocation4], 0
      %s93 = sshll.u32 [#allocation7], 4
      %s94 = int_to_ptr.vmem [resolvable:$true] %s93
      %s95 = sshll.u32 %s3, 4
      %s96 = int_to_ptr.hbm [resolvable:$true] %s95
      %101 = dma.vmem_to_hbm [thread:$0]  %s94, 256, %s96, [#allocation4], 128, 128, 8
    $region25: #{tpu_custom_call.1} parent=1 // pred_fallthru
      _
    // Predicated region
    $region26: #{tpu_custom_call.1} parent=1 // pred_check
      _
    $region27: #{tpu_custom_call.1} parent=1 // pred_check_branch
      %103 = sbr.rel (0) target = $region29
    $region28: #{tpu_custom_call.1} parent=1 // pred_region
      %105 = dma.done [#allocation4], 256
    $region29: #{tpu_custom_call.1} parent=1 // pred_fallthru
      _
    %106 = vsyncpa [#allocation3], 1
    %107 = vsyncpa [#allocation6], 1
    %108 = vsyncpa [#allocation4], 1

</llo_original>
